<compile_context>
chip_gen: v7x
topology: tpu7x:2x2x1
jax: 0.10.0
libtpu: 0.0.40
codegen_flags: <defaults>
</compile_context>

<pallas_src>
import jax
import jax.numpy as jnp
from jax.experimental import pallas as pl
from jax.experimental.pallas import tpu as pltpu

IN_DIM = 28 * 28
HID = 10


def _mlp_kernel(x_ref, w1_ref, b1_ref, w2_ref, b2_ref, w3_ref, b3_ref, o_ref):
    # One batch tile: (TB,784)@(784,10) -> ReLU -> (10,10) -> ReLU -> (10,10)+b.
    # The 10-wide matmuls are negligible FLOPs; everything is hidden under the
    # x DMA (the kernel is HBM-bound on the x stream).
    x = x_ref[...]
    h1 = jnp.dot(x, w1_ref[...], preferred_element_type=jnp.float32) + b1_ref[...]
    h1 = jnp.maximum(h1, 0.0)
    h2 = jnp.dot(h1, w2_ref[...], preferred_element_type=jnp.float32) + b2_ref[...]
    h2 = jnp.maximum(h2, 0.0)
    o = jnp.dot(h2, w3_ref[...], preferred_element_type=jnp.float32) + b3_ref[...]
    o_ref[...] = o.astype(o_ref.dtype)


def _round_up(n, m):
    return -(-n // m) * m


def _device_config():
    """Return (batch-tile target, vmem_limit_bytes or None, two_tensorcores)."""
    vmem_cap = None
    kind = ""
    try:
        vmem_cap = pltpu.get_tpu_info().vmem_capacity_bytes
    except Exception:
        pass
    try:
        kind = jax.devices()[0].device_kind.lower()
    except Exception:
        pass

    is_v7 = ("v7" in kind) or (vmem_cap is not None and vmem_cap <= (80 << 20))
    if is_v7:
        # 64 MiB physical VMEM, 2 TCs, ~3.2 TB/s HBM: big tile amortizes the
        # ~0.35us per-step overhead; leave headroom below physical VMEM.
        # Working set @ TB=4096: x dbl-buf ~29 MiB (784 lanes pad to 896)
        # + out dbl-buf ~4 MiB + (TB,128) f32 intermediates ~6 MiB.
        return 4096, 48 << 20, True
    if "v6" in kind:
        # ~1.4 TB/s HBM: roofline plateaus by tile ~512-1024; TB=2048 fits the
        # default 32 MiB scoped VMEM without raising the limit.
        return 2048, None, False
    if "v5" in kind:
        # ~820 GB/s HBM: per-step DMA is already many microseconds; TB=1024
        # fits the default 16 MiB scoped VMEM.
        return 1024, None, False
    # Unknown part: conservative tile that fits any default scoped VMEM limit.
    return 1024, None, False


def simple_fc_net(x, params):
    """Forward pass of SimpleFCNet.

    x: any shape whose trailing dims flatten to 784 (e.g. (N, 1, 28, 28)),
       float32 (or bf16 if the caller already produces a bf16 stream).
    params: dict with w1 (784,10), b1 (1,10), w2 (10,10), b2 (1,10),
            w3 (10,10), b3 (1,10), all float32.
    Returns: (B, 10) float32 logits.
    """
    x2d = x.reshape(-1, IN_DIM)
    B = x2d.shape[0]
    if B == 0:
        return jnp.zeros((0, HID), jnp.float32)

    tb_target, vmem_limit, two_tc = _device_config()
    TB = tb_target
    if two_tc:
        # Guarantee >= 2 grid steps when possible so the "parallel" batch axis
        # actually shards across both TensorCores.
        TB = min(TB, _round_up(-(-B // 2), 8))
    TB = min(TB, _round_up(B, 8))
    TB = max(TB, 8)
    num_tiles = pl.cdiv(B, TB)

    # First matmul follows x's dtype (w1 is tiny; biases / accumulation stay f32).
    w1 = params["w1"]
    if w1.dtype != x2d.dtype:
        w1 = w1.astype(x2d.dtype)

    # x / out are tiled over the batch; the six weight/bias operands use
    # constant index_maps so they are DMA'd once and stay VMEM-resident.
    x_spec = pl.BlockSpec((TB, IN_DIM), lambda i: (i, 0))
    out_spec = pl.BlockSpec((TB, HID), lambda i: (i, 0))

    def const_spec(shape):
        return pl.BlockSpec(shape, lambda i: (0, 0))

    cp_kwargs = dict(dimension_semantics=("parallel",))
    if vmem_limit is not None:
        cp_kwargs["vmem_limit_bytes"] = vmem_limit

    x_itemsize = jnp.dtype(x2d.dtype).itemsize
    param_bytes = (IN_DIM * HID * jnp.dtype(w1.dtype).itemsize
                   + (3 * HID + 2 * HID * HID) * 4)
    cost = pl.CostEstimate(
        flops=2 * B * (IN_DIM * HID + HID * HID + HID * HID),
        transcendentals=0,
        bytes_accessed=B * IN_DIM * x_itemsize + B * HID * 4 + param_bytes,
    )

    out = pl.pallas_call(
        _mlp_kernel,
        out_shape=jax.ShapeDtypeStruct((B, HID), jnp.float32),
        grid=(num_tiles,),
        in_specs=[
            x_spec,
            const_spec((IN_DIM, HID)), const_spec((1, HID)),
            const_spec((HID, HID)), const_spec((1, HID)),
            const_spec((HID, HID)), const_spec((1, HID)),
        ],
        out_specs=out_spec,
        compiler_params=pltpu.CompilerParams(**cp_kwargs),
        cost_estimate=cost,
    )(x2d, w1, params["b1"], params["w2"], params["b2"],
      params["w3"], params["b3"])

    return out


def init_params(key):
    """Deterministic parameter init mimicking nn.Linear's U(-1/sqrt(fan_in), +)."""
    ks = jax.random.split(key, 6)

    def linear(kw, kb, fan_in, fan_out):
        bound = 1.0 / jnp.sqrt(float(fan_in))
        # stored as (in, out) so the kernel does x @ W
        w = jax.random.uniform(kw, (fan_in, fan_out), jnp.float32, -bound, bound)
        b = jax.random.uniform(kb, (1, fan_out), jnp.float32, -bound, bound)
        return w, b

    w1, b1 = linear(ks[0], ks[1], IN_DIM, HID)
    w2, b2 = linear(ks[2], ks[3], HID, HID)
    w3, b3 = linear(ks[4], ks[5], HID, HID)
    return {"w1": w1, "b1": b1, "w2": w2, "b2": b2, "w3": w3, "b3": b3}


def _reference(x, p):
    x2d = x.reshape(-1, IN_DIM).astype(jnp.float32)
    h1 = jnp.maximum(x2d @ p["w1"] + p["b1"], 0.0)
    h2 = jnp.maximum(h1 @ p["w2"] + p["b2"], 0.0)
    return h2 @ p["w3"] + p["b3"]


if __name__ == "__main__":
    key = jax.random.PRNGKey(0)
    k_param, k_x, k_x2 = jax.random.split(key, 3)

    params = init_params(k_param)

    # MNIST-like input batch: (N, C=1, H=28, W=28)
    x = jax.random.normal(k_x, (8, 1, 28, 28), dtype=jnp.float32)
    ref = _reference(x, params)
    out = jax.block_until_ready(simple_fc_net(x, params))
    assert out.shape == (8, 10)
    assert jnp.allclose(out, ref, atol=1e-4, rtol=1e-4)

    # Ragged batch (exercises the non-divisible last tile path, no wrapper pad).
    x_ragged = jax.random.normal(k_x2, (13, 1, 28, 28), dtype=jnp.float32)
    ref_r = _reference(x_ragged, params)
    out_r = jax.block_until_ready(simple_fc_net(x_ragged, params))
    assert out_r.shape == (13, 10)
    assert jnp.allclose(out_r, ref_r, atol=1e-4, rtol=1e-4)

    print("KERNEL_OK")
</pallas_src>

<mosaic_0001>
module attributes {stable_mosaic.version = 11 : i64} {
  func.func @_mlp_kernel(%arg0: i32, %arg1: memref<8x784xf32, #tpu.memory_space<vmem>>, %arg2: memref<784x10xf32, #tpu.memory_space<vmem>>, %arg3: memref<1x10xf32, #tpu.memory_space<vmem>>, %arg4: memref<10x10xf32, #tpu.memory_space<vmem>>, %arg5: memref<1x10xf32, #tpu.memory_space<vmem>>, %arg6: memref<10x10xf32, #tpu.memory_space<vmem>>, %arg7: memref<1x10xf32, #tpu.memory_space<vmem>>, %arg8: memref<8x10xf32, #tpu.memory_space<vmem>>) attributes {dimension_semantics = [#tpu.dimension_semantics<parallel>], iteration_bounds = array<i64: 1>, scalar_prefetch = 0 : i64, scratch_operands = 0 : i64, tpu.core_type = #tpu.core_type<tc>, window_params = [{transform_indices = @transform_0, window_bounds = array<i64: 8, 784>}, {pipeline_mode = #tpu.pipeline_mode<synchronous>, transform_indices = @transform_1, window_bounds = array<i64: 784, 10>}, {pipeline_mode = #tpu.pipeline_mode<synchronous>, transform_indices = @transform_2, window_bounds = array<i64: 1, 10>}, {pipeline_mode = #tpu.pipeline_mode<synchronous>, transform_indices = @transform_3, window_bounds = array<i64: 10, 10>}, {pipeline_mode = #tpu.pipeline_mode<synchronous>, transform_indices = @transform_4, window_bounds = array<i64: 1, 10>}, {pipeline_mode = #tpu.pipeline_mode<synchronous>, transform_indices = @transform_5, window_bounds = array<i64: 10, 10>}, {pipeline_mode = #tpu.pipeline_mode<synchronous>, transform_indices = @transform_6, window_bounds = array<i64: 1, 10>}, {transform_indices = @transform_7, window_bounds = array<i64: 8, 10>}]} {
    %c0 = arith.constant 0 : index
    %c0_0 = arith.constant 0 : index
    %0 = vector.load %arg1[%c0, %c0_0] : memref<8x784xf32, #tpu.memory_space<vmem>>, vector<8x784xf32>
    %c0_1 = arith.constant 0 : index
    %c0_2 = arith.constant 0 : index
    %1 = vector.load %arg2[%c0_1, %c0_2] : memref<784x10xf32, #tpu.memory_space<vmem>>, vector<784x10xf32>
    %cst = arith.constant dense<0.000000e+00> : vector<8x10xf32>
    %2 = tpu.matmul %0, %1, %cst {dimension_numbers = #tpu.dot_dimension_numbers<[1], [0], [0], [1], [0, 0, 1, 1], [], []>} : vector<8x784xf32>, vector<784x10xf32>, vector<8x10xf32> -> vector<8x10xf32>
    %c0_3 = arith.constant 0 : index
    %c0_4 = arith.constant 0 : index
    %3 = vector.load %arg3[%c0_3, %c0_4] : memref<1x10xf32, #tpu.memory_space<vmem>>, vector<1x10xf32>
    %4 = vector.broadcast %3 : vector<1x10xf32> to vector<8x10xf32>
    %5 = arith.addf %2, %4 : vector<8x10xf32>
    %cst_5 = arith.constant 0.000000e+00 : f32
    %6 = vector.broadcast %cst_5 : f32 to vector<8x10xf32>
    %7 = arith.maximumf %5, %6 : vector<8x10xf32>
    %c0_6 = arith.constant 0 : index
    %c0_7 = arith.constant 0 : index
    %8 = vector.load %arg4[%c0_6, %c0_7] : memref<10x10xf32, #tpu.memory_space<vmem>>, vector<10x10xf32>
    %cst_8 = arith.constant dense<0.000000e+00> : vector<8x10xf32>
    %9 = tpu.matmul %7, %8, %cst_8 {dimension_numbers = #tpu.dot_dimension_numbers<[1], [0], [0], [1], [0, 0, 1, 1], [], []>} : vector<8x10xf32>, vector<10x10xf32>, vector<8x10xf32> -> vector<8x10xf32>
    %c0_9 = arith.constant 0 : index
    %c0_10 = arith.constant 0 : index
    %10 = vector.load %arg5[%c0_9, %c0_10] : memref<1x10xf32, #tpu.memory_space<vmem>>, vector<1x10xf32>
    %11 = vector.broadcast %10 : vector<1x10xf32> to vector<8x10xf32>
    %12 = arith.addf %9, %11 : vector<8x10xf32>
    %cst_11 = arith.constant 0.000000e+00 : f32
    %13 = vector.broadcast %cst_11 : f32 to vector<8x10xf32>
    %14 = arith.maximumf %12, %13 : vector<8x10xf32>
    %c0_12 = arith.constant 0 : index
    %c0_13 = arith.constant 0 : index
    %15 = vector.load %arg6[%c0_12, %c0_13] : memref<10x10xf32, #tpu.memory_space<vmem>>, vector<10x10xf32>
    %cst_14 = arith.constant dense<0.000000e+00> : vector<8x10xf32>
    %16 = tpu.matmul %14, %15, %cst_14 {dimension_numbers = #tpu.dot_dimension_numbers<[1], [0], [0], [1], [0, 0, 1, 1], [], []>} : vector<8x10xf32>, vector<10x10xf32>, vector<8x10xf32> -> vector<8x10xf32>
    %c0_15 = arith.constant 0 : index
    %c0_16 = arith.constant 0 : index
    %17 = vector.load %arg7[%c0_15, %c0_16] : memref<1x10xf32, #tpu.memory_space<vmem>>, vector<1x10xf32>
    %18 = vector.broadcast %17 : vector<1x10xf32> to vector<8x10xf32>
    %19 = arith.addf %16, %18 : vector<8x10xf32>
    %c0_17 = arith.constant 0 : index
    %c0_18 = arith.constant 0 : index
    %20 = vector.load %arg8[%c0_17, %c0_18] : memref<8x10xf32, #tpu.memory_space<vmem>>, vector<8x10xf32>
    tpu.vector_store %arg8[%c0_17, %c0_18], %19 {strides = array<i32>} : memref<8x10xf32, #tpu.memory_space<vmem>>, vector<8x10xf32>,
    return
  }
  func.func @transform_0(%arg0: i32) -> (i32, i32) {
    %c0_i32 = arith.constant 0 : i32
    %c0_i32_0 = arith.constant 0 : i32
    return %arg0, %c0_i32 : i32, i32
  }
  func.func @transform_1(%arg0: i32) -> (i32, i32) {
    %c0_i32 = arith.constant 0 : i32
    %c0_i32_0 = arith.constant 0 : i32
    %c0_i32_1 = arith.constant 0 : i32
    return %c0_i32, %c0_i32_0 : i32, i32
  }
  func.func @transform_2(%arg0: i32) -> (i32, i32) {
    %c0_i32 = arith.constant 0 : i32
    %c0_i32_0 = arith.constant 0 : i32
    %c0_i32_1 = arith.constant 0 : i32
    return %c0_i32, %c0_i32_0 : i32, i32
  }
  func.func @transform_3(%arg0: i32) -> (i32, i32) {
    %c0_i32 = arith.constant 0 : i32
    %c0_i32_0 = arith.constant 0 : i32
    %c0_i32_1 = arith.constant 0 : i32
    return %c0_i32, %c0_i32_0 : i32, i32
  }
  func.func @transform_4(%arg0: i32) -> (i32, i32) {
    %c0_i32 = arith.constant 0 : i32
    %c0_i32_0 = arith.constant 0 : i32
    %c0_i32_1 = arith.constant 0 : i32
    return %c0_i32, %c0_i32_0 : i32, i32
  }
  func.func @transform_5(%arg0: i32) -> (i32, i32) {
    %c0_i32 = arith.constant 0 : i32
    %c0_i32_0 = arith.constant 0 : i32
    %c0_i32_1 = arith.constant 0 : i32
    return %c0_i32, %c0_i32_0 : i32, i32
  }
  func.func @transform_6(%arg0: i32) -> (i32, i32) {
    %c0_i32 = arith.constant 0 : i32
    %c0_i32_0 = arith.constant 0 : i32
    %c0_i32_1 = arith.constant 0 : i32
    return %c0_i32, %c0_i32_0 : i32, i32
  }
  func.func @transform_7(%arg0: i32) -> (i32, i32) {
    %c0_i32 = arith.constant 0 : i32
    %c0_i32_0 = arith.constant 0 : i32
    return %arg0, %c0_i32 : i32, i32
  }
}

</mosaic_0001>

<llo_original>
// kernel: tpu_custom_call.1
$region0: #{tpu_custom_call.1}
  #allocation0 [shape = 'u32[]', space=smem, size = 0x4, offset = 0x4, fixed_abs, tag = 'smem constant byte address 0x4 - core index']
  #allocation1 [shape = 'u32[144,128]{1,0:T(1,128)}', space=vmem, size = 0x12000, scoped, tag = 'internal scratch']
  %s0 = inlined_call_operand.vmem [shape: f32[8,784], index: 0, kind: input, shape index: {}]
  %s1 = inlined_call_operand.vmem [shape: f32[784,10], index: 1, kind: input, shape index: {}]
  %s2 = inlined_call_operand.vmem [shape: f32[1,10], index: 2, kind: input, shape index: {}]
  %s3 = inlined_call_operand.vmem [shape: f32[10,10], index: 3, kind: input, shape index: {}]
  %s4 = inlined_call_operand.vmem [shape: f32[1,10], index: 4, kind: input, shape index: {}]
  %s5 = inlined_call_operand.vmem [shape: f32[10,10], index: 5, kind: input, shape index: {}]
  %s6 = inlined_call_operand.vmem [shape: f32[1,10], index: 6, kind: input, shape index: {}]
  %s7 = inlined_call_operand.hbm [shape: f32[8,10], index: 7, kind: output, shape index: {}]
  %s8 = sld [smem:[#allocation0]]
  $region38: #{tpu_custom_call.1} parent=0
    _
  %s10 = ssub.s32 1, %s8
  %s11 = scalar_select 0, %s10, %s8
  $region1: #{tpu_custom_call.1} parent=0
    #allocation2 [shape = 'u8[4096]{0}', space=vmem, size = 0x1000, scoped, tag = 'output window, operand 0, single buffered']
    #allocation3 [shape = 's32[1]{0}', space=sflag, size = 0x4, scoped, tag = 'scoped memory for tpu_custom_call.1']
    %12 = vsyncpa [#allocation3], 0
    // Predicated region
    $region2: #{tpu_custom_call.1} parent=1 // pred_check
      _
    $region3: #{tpu_custom_call.1} parent=1 // pred_check_branch
      %14 = sbr.rel (0) target = $region5
    $region4: #{tpu_custom_call.1} parent=1 // pred_region
      _
    $region5: #{tpu_custom_call.1} parent=1 // pred_fallthru
      _
    // Predicated region
    $region6: #{tpu_custom_call.1} parent=1 // pred_check
      _
    $region7: #{tpu_custom_call.1} parent=1 // pred_check_branch
      %16 = sbr.rel (0) target = $region9
    $region8: #{tpu_custom_call.1} parent=1 // pred_region
      _
    $region9: #{tpu_custom_call.1} parent=1 // pred_fallthru
      _
    // Predicated region
    $region10: #{tpu_custom_call.1} parent=1 // pred_check
      _
    $region11: #{tpu_custom_call.1} parent=1 // pred_check_branch
      %18 = sbr.rel (0) target = $region13
    $region12: #{tpu_custom_call.1} parent=1 // pred_region
      _
    $region13: #{tpu_custom_call.1} parent=1 // pred_fallthru
      _
    // Predicated region
    $region14: #{tpu_custom_call.1} parent=1 // pred_check
      _
    $region15: #{tpu_custom_call.1} parent=1 // pred_check_branch
      %20 = sbr.rel (0) target = $region17
    $region16: #{tpu_custom_call.1} parent=1 // pred_region
      _
    $region17: #{tpu_custom_call.1} parent=1 // pred_fallthru
      _
    // Predicated region
    $region18: #{tpu_custom_call.1} parent=1 // pred_check
      _
    $region19: #{tpu_custom_call.1} parent=1 // pred_check_branch
      %22 = sbr.rel (0) target = $region21
    $region20: #{tpu_custom_call.1} parent=1 // pred_region
      _
    $region21: #{tpu_custom_call.1} parent=1 // pred_fallthru
      _
    // Predicated region
    $region22: #{tpu_custom_call.1} parent=1 // pred_check
      _
    $region23: #{tpu_custom_call.1} parent=1 // pred_check_branch
      %24 = sbr.rel (0) target = $region25
    $region24: #{tpu_custom_call.1} parent=1 // pred_region
      _
    $region25: #{tpu_custom_call.1} parent=1 // pred_fallthru
      _
    // Predicated region
    $region26: #{tpu_custom_call.1} parent=1 // pred_check
      _
    $region27: #{tpu_custom_call.1} parent=1 // pred_check_branch
      %26 = sbr.rel (0) target = $region29
    $region28: #{tpu_custom_call.1} parent=1 // pred_region
      _
    $region29: #{tpu_custom_call.1} parent=1 // pred_fallthru
      _
    %v27 = vld [vmem:[%s0] sm:$0xff]
    %v28 = vld [vmem:[%s0 + $0x8] sm:$0xff]
    %v29 = vld [vmem:[%s0 + $0x10] sm:$0xff]
    %v30 = vld [vmem:[%s0 + $0x18] sm:$0xff]
    %v31 = vld [vmem:[%s0 + $0x20] sm:$0xff]
    %v32 = vld [vmem:[%s0 + $0x28] sm:$0xff]
    %v33 = vld [vmem:[%s0 + $0x30] sm:$0xff]
    %v34 = vld [vmem:[%s1] sm:$0xff]
    %v35 = vld [vmem:[%s1 + $0x8] sm:$0xff]
    %v36 = vld [vmem:[%s1 + $0x10] sm:$0xff]
    %v37 = vld [vmem:[%s1 + $0x18] sm:$0xff]
    %v38 = vld [vmem:[%s1 + $0x20] sm:$0xff]
    %v39 = vld [vmem:[%s1 + $0x28] sm:$0xff]
    %v40 = vld [vmem:[%s1 + $0x30] sm:$0xff]
    %v41 = vld [vmem:[%s1 + $0x38] sm:$0xff]
    %v42 = vld [vmem:[%s1 + $0x40] sm:$0xff]
    %v43 = vld [vmem:[%s1 + $0x48] sm:$0xff]
    %v44 = vld [vmem:[%s1 + $0x50] sm:$0xff]
    %v45 = vld [vmem:[%s1 + $0x58] sm:$0xff]
    %v46 = vld [vmem:[%s1 + $0x60] sm:$0xff]
    %v47 = vld [vmem:[%s1 + $0x68] sm:$0xff]
    %v48 = vld [vmem:[%s1 + $0x70] sm:$0xff]
    %v49 = vld [vmem:[%s1 + $0x78] sm:$0xff]
    %v50 = vld [vmem:[%s1 + $0x80] sm:$0xff]
    %v51 = vld [vmem:[%s1 + $0x88] sm:$0xff]
    %v52 = vld [vmem:[%s1 + $0x90] sm:$0xff]
    %v53 = vld [vmem:[%s1 + $0x98] sm:$0xff]
    %v54 = vld [vmem:[%s1 + $0xa0] sm:$0xff]
    %v55 = vld [vmem:[%s1 + $0xa8] sm:$0xff]
    %v56 = vld [vmem:[%s1 + $0xb0] sm:$0xff]
    %v57 = vld [vmem:[%s1 + $0xb8] sm:$0xff]
    %v58 = vld [vmem:[%s1 + $0xc0] sm:$0xff]
    %v59 = vld [vmem:[%s1 + $0xc8] sm:$0xff]
    %v60 = vld [vmem:[%s1 + $0xd0] sm:$0xff]
    %v61 = vld [vmem:[%s1 + $0xd8] sm:$0xff]
    %v62 = vld [vmem:[%s1 + $0xe0] sm:$0xff]
    %v63 = vld [vmem:[%s1 + $0xe8] sm:$0xff]
    %v64 = vld [vmem:[%s1 + $0xf0] sm:$0xff]
    %v65 = vld [vmem:[%s1 + $0xf8] sm:$0xff]
    %v66 = vld [vmem:[%s1 + $0x100] sm:$0xff]
    %v67 = vld [vmem:[%s1 + $0x108] sm:$0xff]
    %v68 = vld [vmem:[%s1 + $0x110] sm:$0xff]
    %v69 = vld [vmem:[%s1 + $0x118] sm:$0xff]
    %v70 = vld [vmem:[%s1 + $0x120] sm:$0xff]
    %v71 = vld [vmem:[%s1 + $0x128] sm:$0xff]
    %v72 = vld [vmem:[%s1 + $0x130] sm:$0xff]
    %v73 = vld [vmem:[%s1 + $0x138] sm:$0xff]
    %v74 = vld [vmem:[%s1 + $0x140] sm:$0xff]
    %v75 = vld [vmem:[%s1 + $0x148] sm:$0xff]
    %v76 = vld [vmem:[%s1 + $0x150] sm:$0xff]
    %v77 = vld [vmem:[%s1 + $0x158] sm:$0xff]
    %v78 = vld [vmem:[%s1 + $0x160] sm:$0xff]
    %v79 = vld [vmem:[%s1 + $0x168] sm:$0xff]
    %v80 = vld [vmem:[%s1 + $0x170] sm:$0xff]
    %v81 = vld [vmem:[%s1 + $0x178] sm:$0xff]
    %v82 = vld [vmem:[%s1 + $0x180] sm:$0xff]
    %v83 = vld [vmem:[%s1 + $0x188] sm:$0xff]
    %v84 = vld [vmem:[%s1 + $0x190] sm:$0xff]
    %v85 = vld [vmem:[%s1 + $0x198] sm:$0xff]
    %v86 = vld [vmem:[%s1 + $0x1a0] sm:$0xff]
    %v87 = vld [vmem:[%s1 + $0x1a8] sm:$0xff]
    %v88 = vld [vmem:[%s1 + $0x1b0] sm:$0xff]
    %v89 = vld [vmem:[%s1 + $0x1b8] sm:$0xff]
    %v90 = vld [vmem:[%s1 + $0x1c0] sm:$0xff]
    %v91 = vld [vmem:[%s1 + $0x1c8] sm:$0xff]
    %v92 = vld [vmem:[%s1 + $0x1d0] sm:$0xff]
    %v93 = vld [vmem:[%s1 + $0x1d8] sm:$0xff]
    %v94 = vld [vmem:[%s1 + $0x1e0] sm:$0xff]
    %v95 = vld [vmem:[%s1 + $0x1e8] sm:$0xff]
    %v96 = vld [vmem:[%s1 + $0x1f0] sm:$0xff]
    %v97 = vld [vmem:[%s1 + $0x1f8] sm:$0xff]
    %v98 = vld [vmem:[%s1 + $0x200] sm:$0xff]
    %v99 = vld [vmem:[%s1 + $0x208] sm:$0xff]
    %v100 = vld [vmem:[%s1 + $0x210] sm:$0xff]
    %v101 = vld [vmem:[%s1 + $0x218] sm:$0xff]
    %v102 = vld [vmem:[%s1 + $0x220] sm:$0xff]
    %v103 = vld [vmem:[%s1 + $0x228] sm:$0xff]
    %v104 = vld [vmem:[%s1 + $0x230] sm:$0xff]
    %v105 = vld [vmem:[%s1 + $0x238] sm:$0xff]
    %v106 = vld [vmem:[%s1 + $0x240] sm:$0xff]
    %v107 = vld [vmem:[%s1 + $0x248] sm:$0xff]
    %v108 = vld [vmem:[%s1 + $0x250] sm:$0xff]
    %v109 = vld [vmem:[%s1 + $0x258] sm:$0xff]
    %v110 = vld [vmem:[%s1 + $0x260] sm:$0xff]
    %v111 = vld [vmem:[%s1 + $0x268] sm:$0xff]
    %v112 = vld [vmem:[%s1 + $0x270] sm:$0xff]
    %v113 = vld [vmem:[%s1 + $0x278] sm:$0xff]
    %v114 = vld [vmem:[%s1 + $0x280] sm:$0xff]
    %v115 = vld [vmem:[%s1 + $0x288] sm:$0xff]
    %v116 = vld [vmem:[%s1 + $0x290] sm:$0xff]
    %v117 = vld [vmem:[%s1 + $0x298] sm:$0xff]
    %v118 = vld [vmem:[%s1 + $0x2a0] sm:$0xff]
    %v119 = vld [vmem:[%s1 + $0x2a8] sm:$0xff]
    %v120 = vld [vmem:[%s1 + $0x2b0] sm:$0xff]
    %v121 = vld [vmem:[%s1 + $0x2b8] sm:$0xff]
    %v122 = vld [vmem:[%s1 + $0x2c0] sm:$0xff]
    %v123 = vld [vmem:[%s1 + $0x2c8] sm:$0xff]
    %v124 = vld [vmem:[%s1 + $0x2d0] sm:$0xff]
    %v125 = vld [vmem:[%s1 + $0x2d8] sm:$0xff]
    %v126 = vld [vmem:[%s1 + $0x2e0] sm:$0xff]
    %v127 = vld [vmem:[%s1 + $0x2e8] sm:$0xff]
    %v128 = vld [vmem:[%s1 + $0x2f0] sm:$0xff]
    %v129 = vld [vmem:[%s1 + $0x2f8] sm:$0xff]
    %v130 = vld [vmem:[%s1 + $0x300] sm:$0xff]
    %v131 = vld [vmem:[%s1 + $0x308] sm:$0xff]
    %v132 = vld [vmem:[%s2] sm:$0x1]
    %v134 = vlaneseq
    %v135 = vshrl.u32 %v134, 7
    %v136 = vsub.s32 0, %v135
    %v137 = vrot.slane %v132, %v136
    %vm139 = vcmask 130048
    %v141 = vsel %vm139, %v33, 0
    %143 = vmatprep.subr.mxu0 0.0
    %144 = vmatpush1.msra.mxu0 %v34
    %145 = vmatprep.subr.mxu0 0.0
    %146 = vmatpush1.msra.mxu0 %v35
    %147 = vmatprep.subr.mxu0 0.0
    %148 = vmatpush1.msra.mxu0 %v36
    %149 = vmatprep.subr.mxu0 0.0
    %150 = vmatpush1.msra.mxu0 %v37
    %151 = vmatprep.subr.mxu0 0.0
    %152 = vmatpush1.msra.mxu0 %v38
    %153 = vmatprep.subr.mxu0 0.0
    %154 = vmatpush1.msra.mxu0 %v39
    %155 = vmatprep.subr.mxu0 0.0
    %156 = vmatpush1.msra.mxu0 %v40
    %157 = vmatprep.subr.mxu0 0.0
    %158 = vmatpush1.msra.mxu0 %v41
    %159 = vmatprep.subr.mxu0 0.0
    %160 = vmatpush1.msra.mxu0 %v42
    %161 = vmatprep.subr.mxu0 0.0
    %162 = vmatpush1.msra.mxu0 %v43
    %163 = vmatprep.subr.mxu0 0.0
    %164 = vmatpush1.msra.mxu0 %v44
    %165 = vmatprep.subr.mxu0 0.0
    %166 = vmatpush1.msra.mxu0 %v45
    %167 = vmatprep.subr.mxu0 0.0
    %168 = vmatpush1.msra.mxu0 %v46
    %169 = vmatprep.subr.mxu0 0.0
    %170 = vmatpush1.msra.mxu0 %v47
    %171 = vmatprep.subr.mxu0 0.0
    %172 = vmatpush1.msra.mxu0 %v48
    %173 = vmatprep.subr.mxu0 0.0
    %174 = vmatpush1.msra.mxu0 %v49
    %175 = vmatprep.subr.mxu0 0.0
    %176 = vmatpush1.msra.mxu0 %v50
    %177 = vmatprep.subr.mxu0 0.0
    %178 = vmatpush1.msra.mxu0 %v51
    %179 = vmatprep.subr.mxu0 0.0
    %180 = vmatpush1.msra.mxu0 %v52
    %181 = vmatprep.subr.mxu0 0.0
    %182 = vmatpush1.msra.mxu0 %v53
    %183 = vmatprep.subr.mxu0 0.0
    %184 = vmatpush1.msra.mxu0 %v54
    %185 = vmatprep.subr.mxu0 0.0
    %186 = vmatpush1.msra.mxu0 %v55
    %187 = vmatprep.subr.mxu0 0.0
    %188 = vmatpush1.msra.mxu0 %v56
    %189 = vmatprep.subr.mxu0 0.0
    %190 = vmatpush1.msra.mxu0 %v57
    %191 = vmatprep.subr.mxu0 0.0
    %192 = vmatpush1.msra.mxu0 %v58
    %193 = vmatprep.subr.mxu0 0.0
    %194 = vmatpush1.msra.mxu0 %v59
    %195 = vmatprep.subr.mxu0 0.0
    %196 = vmatpush1.msra.mxu0 %v60
    %197 = vmatprep.subr.mxu0 0.0
    %198 = vmatpush1.msra.mxu0 %v61
    %199 = vmatprep.subr.mxu0 0.0
    %200 = vmatpush1.msra.mxu0 %v62
    %201 = vmatprep.subr.mxu0 0.0
    %202 = vmatpush1.msra.mxu0 %v63
    %203 = vmatprep.subr.mxu0 0.0
    %204 = vmatpush1.msra.mxu0 %v64
    %205 = vmatprep.subr.mxu0 0.0
    %206 = vmatpush1.msra.mxu0 %v65
    %207 = vmatprep.mubr.f32.mxu0 %v28
    %208 = vmatmul.mubr.f32.gmra.mrb[0].mxu0 %v27
    %v209 = vpop.f32.mrb[0].mxu0
    %v210 = vadd.f32 %v137, %v209
    %v211 = vpop.f32.mrb[0].mxu0
    %212 = vdwg.mxu0
    %213 = vmatprep.subr.mxu0 0.0
    %214 = vmatpush1.msra.mxu0 %v66
    %215 = vmatprep.subr.mxu0 0.0
    %216 = vmatpush1.msra.mxu0 %v67
    %217 = vmatprep.subr.mxu0 0.0
    %218 = vmatpush1.msra.mxu0 %v68
    %219 = vmatprep.subr.mxu0 0.0
    %220 = vmatpush1.msra.mxu0 %v69
    %221 = vmatprep.subr.mxu0 0.0
    %222 = vmatpush1.msra.mxu0 %v70
    %223 = vmatprep.subr.mxu0 0.0
    %224 = vmatpush1.msra.mxu0 %v71
    %225 = vmatprep.subr.mxu0 0.0
    %226 = vmatpush1.msra.mxu0 %v72
    %227 = vmatprep.subr.mxu0 0.0
    %228 = vmatpush1.msra.mxu0 %v73
    %229 = vmatprep.subr.mxu0 0.0
    %230 = vmatpush1.msra.mxu0 %v74
    %231 = vmatprep.subr.mxu0 0.0
    %232 = vmatpush1.msra.mxu0 %v75
    %233 = vmatprep.subr.mxu0 0.0
    %234 = vmatpush1.msra.mxu0 %v76
    %235 = vmatprep.subr.mxu0 0.0
    %236 = vmatpush1.msra.mxu0 %v77
    %237 = vmatprep.subr.mxu0 0.0
    %238 = vmatpush1.msra.mxu0 %v78
    %239 = vmatprep.subr.mxu0 0.0
    %240 = vmatpush1.msra.mxu0 %v79
    %241 = vmatprep.subr.mxu0 0.0
    %242 = vmatpush1.msra.mxu0 %v80
    %243 = vmatprep.subr.mxu0 0.0
    %244 = vmatpush1.msra.mxu0 %v81
    %245 = vmatprep.subr.mxu0 0.0
    %246 = vmatpush1.msra.mxu0 %v82
    %247 = vmatprep.subr.mxu0 0.0
    %248 = vmatpush1.msra.mxu0 %v83
    %249 = vmatprep.subr.mxu0 0.0
    %250 = vmatpush1.msra.mxu0 %v84
    %251 = vmatprep.subr.mxu0 0.0
    %252 = vmatpush1.msra.mxu0 %v85
    %253 = vmatprep.subr.mxu0 0.0
    %254 = vmatpush1.msra.mxu0 %v86
    %255 = vmatprep.subr.mxu0 0.0
    %256 = vmatpush1.msra.mxu0 %v87
    %257 = vmatprep.subr.mxu0 0.0
    %258 = vmatpush1.msra.mxu0 %v88
    %259 = vmatprep.subr.mxu0 0.0
    %260 = vmatpush1.msra.mxu0 %v89
    %261 = vmatprep.subr.mxu0 0.0
    %262 = vmatpush1.msra.mxu0 %v90
    %263 = vmatprep.subr.mxu0 0.0
    %264 = vmatpush1.msra.mxu0 %v91
    %265 = vmatprep.subr.mxu0 0.0
    %266 = vmatpush1.msra.mxu0 %v92
    %267 = vmatprep.subr.mxu0 0.0
    %268 = vmatpush1.msra.mxu0 %v93
    %269 = vmatprep.subr.mxu0 0.0
    %270 = vmatpush1.msra.mxu0 %v94
    %271 = vmatprep.subr.mxu0 0.0
    %272 = vmatpush1.msra.mxu0 %v95
    %273 = vmatprep.subr.mxu0 0.0
    %274 = vmatpush1.msra.mxu0 %v96
    %275 = vmatprep.subr.mxu0 0.0
    %276 = vmatpush1.msra.mxu0 %v97
    %277 = vmatprep.mubr.f32.mxu0 %v30
    %278 = vmatmul.mubr.f32.gmra.mrb[0].mxu0 %v29
    %v279 = vpop.f32.mrb[0].mxu0
    %v280 = vadd.f32 %v210, %v279
    %v281 = vpop.f32.mrb[0].mxu0
    %282 = vdwg.mxu0
    %283 = vmatprep.subr.mxu0 0.0
    %284 = vmatpush1.msra.mxu0 %v98
    %285 = vmatprep.subr.mxu0 0.0
    %286 = vmatpush1.msra.mxu0 %v99
    %287 = vmatprep.subr.mxu0 0.0
    %288 = vmatpush1.msra.mxu0 %v100
    %289 = vmatprep.subr.mxu0 0.0
    %290 = vmatpush1.msra.mxu0 %v101
    %291 = vmatprep.subr.mxu0 0.0
    %292 = vmatpush1.msra.mxu0 %v102
    %293 = vmatprep.subr.mxu0 0.0
    %294 = vmatpush1.msra.mxu0 %v103
    %295 = vmatprep.subr.mxu0 0.0
    %296 = vmatpush1.msra.mxu0 %v104
    %297 = vmatprep.subr.mxu0 0.0
    %298 = vmatpush1.msra.mxu0 %v105
    %299 = vmatprep.subr.mxu0 0.0
    %300 = vmatpush1.msra.mxu0 %v106
    %301 = vmatprep.subr.mxu0 0.0
    %302 = vmatpush1.msra.mxu0 %v107
    %303 = vmatprep.subr.mxu0 0.0
    %304 = vmatpush1.msra.mxu0 %v108
    %305 = vmatprep.subr.mxu0 0.0
    %306 = vmatpush1.msra.mxu0 %v109
    %307 = vmatprep.subr.mxu0 0.0
    %308 = vmatpush1.msra.mxu0 %v110
    %309 = vmatprep.subr.mxu0 0.0
    %310 = vmatpush1.msra.mxu0 %v111
    %311 = vmatprep.subr.mxu0 0.0
    %312 = vmatpush1.msra.mxu0 %v112
    %313 = vmatprep.subr.mxu0 0.0
    %314 = vmatpush1.msra.mxu0 %v113
    %315 = vmatprep.subr.mxu0 0.0
    %316 = vmatpush1.msra.mxu0 %v114
    %317 = vmatprep.subr.mxu0 0.0
    %318 = vmatpush1.msra.mxu0 %v115
    %319 = vmatprep.subr.mxu0 0.0
    %320 = vmatpush1.msra.mxu0 %v116
    %321 = vmatprep.subr.mxu0 0.0
    %322 = vmatpush1.msra.mxu0 %v117
    %323 = vmatprep.subr.mxu0 0.0
    %324 = vmatpush1.msra.mxu0 %v118
    %325 = vmatprep.subr.mxu0 0.0
    %326 = vmatpush1.msra.mxu0 %v119
    %327 = vmatprep.subr.mxu0 0.0
    %328 = vmatpush1.msra.mxu0 %v120
    %329 = vmatprep.subr.mxu0 0.0
    %330 = vmatpush1.msra.mxu0 %v121
    %331 = vmatprep.subr.mxu0 0.0
    %332 = vmatpush1.msra.mxu0 %v122
    %333 = vmatprep.subr.mxu0 0.0
    %334 = vmatpush1.msra.mxu0 %v123
    %335 = vmatprep.subr.mxu0 0.0
    %336 = vmatpush1.msra.mxu0 %v124
    %337 = vmatprep.subr.mxu0 0.0
    %338 = vmatpush1.msra.mxu0 %v125
    %339 = vmatprep.subr.mxu0 0.0
    %340 = vmatpush1.msra.mxu0 %v126
    %341 = vmatprep.subr.mxu0 0.0
    %342 = vmatpush1.msra.mxu0 %v127
    %343 = vmatprep.subr.mxu0 0.0
    %344 = vmatpush1.msra.mxu0 %v128
    %345 = vmatprep.subr.mxu0 0.0
    %346 = vmatpush1.msra.mxu0 %v129
    %347 = vmatprep.mubr.f32.mxu0 %v32
    %348 = vmatmul.mubr.f32.gmra.mrb[0].mxu0 %v31
    %v349 = vpop.f32.mrb[0].mxu0
    %v350 = vadd.f32 %v280, %v349
    %v351 = vpop.f32.mrb[0].mxu0
    %352 = vdwg.mxu0
    %353 = vmatprep.subr.mxu0 0.0
    %354 = vmatpush1.msra.mxu0 %v130
    %355 = vmatprep.subr.mxu0 0.0
    %356 = vmatpush1.msra.mxu0 %v131
    %357 = vmatprep.subr.mxu0 0.0
    %358 = vmatpush1.msra.mxu0 0.0
    %359 = vmatprep.subr.mxu0 0.0
    %360 = vmatpush1.msra.mxu0 0.0
    %361 = vmatprep.subr.mxu0 0.0
    %362 = vmatpush1.msra.mxu0 0.0
    %363 = vmatprep.subr.mxu0 0.0
    %364 = vmatpush1.msra.mxu0 0.0
    %365 = vmatprep.subr.mxu0 0.0
    %366 = vmatpush1.msra.mxu0 0.0
    %367 = vmatprep.subr.mxu0 0.0
    %368 = vmatpush1.msra.mxu0 0.0
    %369 = vmatprep.subr.mxu0 0.0
    %370 = vmatpush1.msra.mxu0 0.0
    %371 = vmatprep.subr.mxu0 0.0
    %372 = vmatpush1.msra.mxu0 0.0
    %373 = vmatprep.subr.mxu0 0.0
    %374 = vmatpush1.msra.mxu0 0.0
    %375 = vmatprep.subr.mxu0 0.0
    %376 = vmatpush1.msra.mxu0 0.0
    %377 = vmatprep.subr.mxu0 0.0
    %378 = vmatpush1.msra.mxu0 0.0
    %379 = vmatprep.subr.mxu0 0.0
    %380 = vmatpush1.msra.mxu0 0.0
    %381 = vmatprep.subr.mxu0 0.0
    %382 = vmatpush1.msra.mxu0 0.0
    %383 = vmatprep.subr.mxu0 0.0
    %384 = vmatpush1.msra.mxu0 0.0
    %385 = vmatprep.subr.mxu0 0.0
    %386 = vmatpush1.msra.mxu0 0.0
    %387 = vmatprep.subr.mxu0 0.0
    %388 = vmatpush1.msra.mxu0 0.0
    %389 = vmatprep.subr.mxu0 0.0
    %390 = vmatpush1.msra.mxu0 0.0
    %391 = vmatprep.subr.mxu0 0.0
    %392 = vmatpush1.msra.mxu0 0.0
    %393 = vmatprep.subr.mxu0 0.0
    %394 = vmatpush1.msra.mxu0 0.0
    %395 = vmatprep.subr.mxu0 0.0
    %396 = vmatpush1.msra.mxu0 0.0
    %397 = vmatprep.subr.mxu0 0.0
    %398 = vmatpush1.msra.mxu0 0.0
    %399 = vmatprep.subr.mxu0 0.0
    %400 = vmatpush1.msra.mxu0 0.0
    %401 = vmatprep.subr.mxu0 0.0
    %402 = vmatpush1.msra.mxu0 0.0
    %403 = vmatprep.subr.mxu0 0.0
    %404 = vmatpush1.msra.mxu0 0.0
    %405 = vmatprep.subr.mxu0 0.0
    %406 = vmatpush1.msra.mxu0 0.0
    %407 = vmatprep.subr.mxu0 0.0
    %408 = vmatpush1.msra.mxu0 0.0
    %409 = vmatprep.subr.mxu0 0.0
    %410 = vmatpush1.msra.mxu0 0.0
    %411 = vmatprep.subr.mxu0 0.0
    %412 = vmatpush1.msra.mxu0 0.0
    %413 = vmatprep.subr.mxu0 0.0
    %414 = vmatpush1.msra.mxu0 0.0
    %415 = vmatprep.subr.mxu0 0.0
    %416 = vmatpush1.msra.mxu0 0.0
    %417 = vmatprep.mubr.f32.mxu0 0.0
    %418 = vmatmul.mubr.f32.gmra.mrb[0].mxu0 %v141
    %v419 = vpop.f32.mrb[0].mxu0
    %v420 = vadd.f32 %v350, %v419
    %v421 = vpop.f32.mrb[0].mxu0
    %422 = vdwg.mxu0
    %v423 = vmax.f32 %v420, 0.0
    %v424 = vld [vmem:[%s3] sm:$0xff]
    %v425 = vld [vmem:[%s3 + $0x8] sm:$0x3]
    %v426 = vld [vmem:[%s4] sm:$0x1]
    %v428 = vlaneseq
    %v429 = vshrl.u32 %v428, 7
    %v430 = vsub.s32 0, %v429
    %v431 = vrot.slane %v426, %v430
    %vm433 = vcmask 80896
    %v435 = vsel %vm433, %v423, 0
    %vm437 = vcmask 1041408
    %v439 = vsel %vm437, %v425, 0
    %441 = vmatprep.subr.mxu0 0.0
    %442 = vmatpush1.msra.mxu0 %v424
    %443 = vmatprep.subr.mxu0 0.0
    %444 = vmatpush1.msra.mxu0 %v439
    %445 = vmatprep.subr.mxu0 0.0
    %446 = vmatpush1.msra.mxu0 0.0
    %447 = vmatprep.subr.mxu0 0.0
    %448 = vmatpush1.msra.mxu0 0.0
    %449 = vmatprep.subr.mxu0 0.0
    %450 = vmatpush1.msra.mxu0 0.0
    %451 = vmatprep.subr.mxu0 0.0
    %452 = vmatpush1.msra.mxu0 0.0
    %453 = vmatprep.subr.mxu0 0.0
    %454 = vmatpush1.msra.mxu0 0.0
    %455 = vmatprep.subr.mxu0 0.0
    %456 = vmatpush1.msra.mxu0 0.0
    %457 = vmatprep.subr.mxu0 0.0
    %458 = vmatpush1.msra.mxu0 0.0
    %459 = vmatprep.subr.mxu0 0.0
    %460 = vmatpush1.msra.mxu0 0.0
    %461 = vmatprep.subr.mxu0 0.0
    %462 = vmatpush1.msra.mxu0 0.0
    %463 = vmatprep.subr.mxu0 0.0
    %464 = vmatpush1.msra.mxu0 0.0
    %465 = vmatprep.subr.mxu0 0.0
    %466 = vmatpush1.msra.mxu0 0.0
    %467 = vmatprep.subr.mxu0 0.0
    %468 = vmatpush1.msra.mxu0 0.0
    %469 = vmatprep.subr.mxu0 0.0
    %470 = vmatpush1.msra.mxu0 0.0
    %471 = vmatprep.subr.mxu0 0.0
    %472 = vmatpush1.msra.mxu0 0.0
    %473 = vmatprep.subr.mxu0 0.0
    %474 = vmatpush1.msra.mxu0 0.0
    %475 = vmatprep.subr.mxu0 0.0
    %476 = vmatpush1.msra.mxu0 0.0
    %477 = vmatprep.subr.mxu0 0.0
    %478 = vmatpush1.msra.mxu0 0.0
    %479 = vmatprep.subr.mxu0 0.0
    %480 = vmatpush1.msra.mxu0 0.0
    %481 = vmatprep.subr.mxu0 0.0
    %482 = vmatpush1.msra.mxu0 0.0
    %483 = vmatprep.subr.mxu0 0.0
    %484 = vmatpush1.msra.mxu0 0.0
    %485 = vmatprep.subr.mxu0 0.0
    %486 = vmatpush1.msra.mxu0 0.0
    %487 = vmatprep.subr.mxu0 0.0
    %488 = vmatpush1.msra.mxu0 0.0
    %489 = vmatprep.subr.mxu0 0.0
    %490 = vmatpush1.msra.mxu0 0.0
    %491 = vmatprep.subr.mxu0 0.0
    %492 = vmatpush1.msra.mxu0 0.0
    %493 = vmatprep.subr.mxu0 0.0
    %494 = vmatpush1.msra.mxu0 0.0
    %495 = vmatprep.subr.mxu0 0.0
    %496 = vmatpush1.msra.mxu0 0.0
    %497 = vmatprep.subr.mxu0 0.0
    %498 = vmatpush1.msra.mxu0 0.0
    %499 = vmatprep.subr.mxu0 0.0
    %500 = vmatpush1.msra.mxu0 0.0
    %501 = vmatprep.subr.mxu0 0.0
    %502 = vmatpush1.msra.mxu0 0.0
    %503 = vmatprep.subr.mxu0 0.0
    %504 = vmatpush1.msra.mxu0 0.0
    %505 = vmatprep.mubr.f32.mxu0 0.0
    %506 = vmatmul.mubr.f32.gmra.mrb[0].mxu0 %v435
    %v507 = vpop.f32.mrb[0].mxu0
    %v508 = vadd.f32 %v431, %v507
    %v509 = vpop.f32.mrb[0].mxu0
    %510 = vdwg.mxu0
    %v511 = vmax.f32 %v508, 0.0
    %v512 = vld [vmem:[%s5] sm:$0xff]
    %v513 = vld [vmem:[%s5 + $0x8] sm:$0x3]
    %v514 = vld [vmem:[%s6] sm:$0x1]
    %v516 = vlaneseq
    %v517 = vshrl.u32 %v516, 7
    %v518 = vsub.s32 0, %v517
    %v519 = vrot.slane %v514, %v518
    %v522 = vsel %vm433, %v511, 0
    %v525 = vsel %vm437, %v513, 0
    %527 = vmatprep.subr.mxu0 0.0
    %528 = vmatpush1.msra.mxu0 %v512
    %529 = vmatprep.subr.mxu0 0.0
    %530 = vmatpush1.msra.mxu0 %v525
    %531 = vmatprep.subr.mxu0 0.0
    %532 = vmatpush1.msra.mxu0 0.0
    %533 = vmatprep.subr.mxu0 0.0
    %534 = vmatpush1.msra.mxu0 0.0
    %535 = vmatprep.subr.mxu0 0.0
    %536 = vmatpush1.msra.mxu0 0.0
    %537 = vmatprep.subr.mxu0 0.0
    %538 = vmatpush1.msra.mxu0 0.0
    %539 = vmatprep.subr.mxu0 0.0
    %540 = vmatpush1.msra.mxu0 0.0
    %541 = vmatprep.subr.mxu0 0.0
    %542 = vmatpush1.msra.mxu0 0.0
    %543 = vmatprep.subr.mxu0 0.0
    %544 = vmatpush1.msra.mxu0 0.0
    %545 = vmatprep.subr.mxu0 0.0
    %546 = vmatpush1.msra.mxu0 0.0
    %547 = vmatprep.subr.mxu0 0.0
    %548 = vmatpush1.msra.mxu0 0.0
    %549 = vmatprep.subr.mxu0 0.0
    %550 = vmatpush1.msra.mxu0 0.0
    %551 = vmatprep.subr.mxu0 0.0
    %552 = vmatpush1.msra.mxu0 0.0
    %553 = vmatprep.subr.mxu0 0.0
    %554 = vmatpush1.msra.mxu0 0.0
    %555 = vmatprep.subr.mxu0 0.0
    %556 = vmatpush1.msra.mxu0 0.0
    %557 = vmatprep.subr.mxu0 0.0
    %558 = vmatpush1.msra.mxu0 0.0
    %559 = vmatprep.subr.mxu0 0.0
    %560 = vmatpush1.msra.mxu0 0.0
    %561 = vmatprep.subr.mxu0 0.0
    %562 = vmatpush1.msra.mxu0 0.0
    %563 = vmatprep.subr.mxu0 0.0
    %564 = vmatpush1.msra.mxu0 0.0
    %565 = vmatprep.subr.mxu0 0.0
    %566 = vmatpush1.msra.mxu0 0.0
    %567 = vmatprep.subr.mxu0 0.0
    %568 = vmatpush1.msra.mxu0 0.0
    %569 = vmatprep.subr.mxu0 0.0
    %570 = vmatpush1.msra.mxu0 0.0
    %571 = vmatprep.subr.mxu0 0.0
    %572 = vmatpush1.msra.mxu0 0.0
    %573 = vmatprep.subr.mxu0 0.0
    %574 = vmatpush1.msra.mxu0 0.0
    %575 = vmatprep.subr.mxu0 0.0
    %576 = vmatpush1.msra.mxu0 0.0
    %577 = vmatprep.subr.mxu0 0.0
    %578 = vmatpush1.msra.mxu0 0.0
    %579 = vmatprep.subr.mxu0 0.0
    %580 = vmatpush1.msra.mxu0 0.0
    %581 = vmatprep.subr.mxu0 0.0
    %582 = vmatpush1.msra.mxu0 0.0
    %583 = vmatprep.subr.mxu0 0.0
    %584 = vmatpush1.msra.mxu0 0.0
    %585 = vmatprep.subr.mxu0 0.0
    %586 = vmatpush1.msra.mxu0 0.0
    %587 = vmatprep.subr.mxu0 0.0
    %588 = vmatpush1.msra.mxu0 0.0
    %589 = vmatprep.subr.mxu0 0.0
    %590 = vmatpush1.msra.mxu0 0.0
    %591 = vmatprep.mubr.f32.mxu0 0.0
    %592 = vmatmul.mubr.f32.gmra.mrb[0].mxu0 %v522
    %v593 = vpop.f32.mrb[0].mxu0
    %v594 = vadd.f32 %v519, %v593
    %v595 = vpop.f32.mrb[0].mxu0
    %596 = vdwg.mxu0
    %597 = vst.msk [vmem:[#allocation2] sm:$0xff] %vm433, %v594
    // Predicated region
    $region30: #{tpu_custom_call.1} parent=1 // pred_check
      _
    $region31: #{tpu_custom_call.1} parent=1 // pred_check_branch
      %599 = sbr.rel (0) target = $region33
    $region32: #{tpu_custom_call.1} parent=1 // pred_region
      %s601 = ssub.s32 128, 128
      %602 = vsyncadd [#allocation3], %s601
      %s604 = sshll.u32 [#allocation2], 4
      %s605 = int_to_ptr.vmem [resolvable:$true] %s604
      %607 = dma.vmem_to_hbm [thread:$0]  %s605, 128, %s7, [#allocation3]
    $region33: #{tpu_custom_call.1} parent=1 // pred_fallthru
      _
    // Predicated region
    $region34: #{tpu_custom_call.1} parent=1 // pred_check
      _
    $region35: #{tpu_custom_call.1} parent=1 // pred_check_branch
      %609 = sbr.rel (0) target = $region37
    $region36: #{tpu_custom_call.1} parent=1 // pred_region
      %610 = dma.done [#allocation3], 128
    $region37: #{tpu_custom_call.1} parent=1 // pred_fallthru
      _
    %611 = vsyncpa [#allocation3], 1

</llo_original>
